<compile_context>
chip_gen: v7x
topology: tpu7x:2x2x1
jax: 0.10.0
libtpu: 0.0.40
codegen_flags: <defaults>
</compile_context>

<pallas_src>
import functools

import jax
import jax.numpy as jnp
from jax.experimental import pallas as pl
from jax.experimental.pallas import tpu as pltpu


def _pose_each_kernel(x_ref, w_ref, b_ref, o_ref):
    # x_ref: [B_TILE, H*J]   (lane-dense contraction axis)
    # w_ref: [H*J, J]        (block-structured per-joint weights)
    # b_ref: [1, J]
    # o_ref: [B_TILE, J]
    acc = jnp.dot(
        x_ref[...].astype(jnp.float32),
        w_ref[...].astype(jnp.float32),
        preferred_element_type=jnp.float32,
    )                                                   # single MXU pass (K=H*J)
    o_ref[...] = (acc + b_ref[...].astype(jnp.float32)).astype(o_ref.dtype)


def pose_each_discriminator(comm_features, weights, biases, *, b_tile=512):
    """comm_features: [B, H, J]; weights: [J, H]; biases: [J] -> out [B, J]."""
    B, H, J = comm_features.shape
    assert weights.shape == (J, H)
    assert biases.shape == (J,)

    # Free layout change: merge trailing dims (row-major contiguous), no HBM pass.
    x = comm_features.reshape(B, H * J)                  # [B, H*J]

    # Block-structured weight so all J heads become one matmul:
    #   Wmat[h*J + j, j] = W[j, h], zero elsewhere.
    # Tiny (H*J x J); in a real model this would be built once at param load.
    w_t = weights.T                                      # [H, J]
    eye = jnp.eye(J, dtype=weights.dtype)                # [J, J]
    w_mat = (w_t[:, :, None] * eye[None, :, :]).reshape(H * J, J)
    b2 = biases.reshape(1, J)

    # Batch tile: full extent when small (legal even if not a multiple of 8),
    # otherwise 512 rows (multiple of 8, ~0.5 MiB/tile input -> trivially fits
    # double-buffered in 64 MiB v7x VMEM).
    bt = B if B <= b_tile else b_tile
    grid = (pl.cdiv(B, bt),)
    # TODO(synk): for production B not a multiple of b_tile, rely on Pallas
    # partial-block masking (rows are independent, so padded rows are dropped).

    out = pl.pallas_call(
        _pose_each_kernel,
        out_shape=jax.ShapeDtypeStruct((B, J), comm_features.dtype),
        grid=grid,
        in_specs=[
            pl.BlockSpec((bt, H * J), lambda i: (i, 0)),   # batch-tiled input
            pl.BlockSpec((H * J, J), lambda i: (0, 0)),    # resident weights
            pl.BlockSpec((1, J), lambda i: (0, 0)),        # resident bias
        ],
        out_specs=pl.BlockSpec((bt, J), lambda i: (i, 0)),
        compiler_params=pltpu.CompilerParams(
            dimension_semantics=("parallel",),
            vmem_limit_bytes=32 * 1024 * 1024,
        ),
    )(x, w_mat, b2)
    return out


def reference(comm_features, weights, biases):
    # out[b, j] = sum_h x[b, h, j] * W[j, h] + bias[j]
    return jnp.einsum("bhj,jh->bj", comm_features, weights) + biases[None, :]


if __name__ == "__main__":
    key = jax.random.PRNGKey(0)
    B, H, J = 2, 32, 8   # batch, hidden_poseeach, num_joints

    k_x, k_w, k_b = jax.random.split(key, 3)
    comm_features = jax.random.normal(k_x, (B, H, J), dtype=jnp.float32)
    # Deterministic synthetic params (stand-in for the J Linear(H, 1) layers).
    weights = jax.random.normal(k_w, (J, H), dtype=jnp.float32) * 0.1
    biases = jax.random.normal(k_b, (J,), dtype=jnp.float32) * 0.1

    out = pose_each_discriminator(comm_features, weights, biases)
    out = jax.block_until_ready(out)

    ref = reference(comm_features, weights, biases)
    assert out.shape == (B, J), out.shape
    assert jnp.allclose(out, ref, atol=1e-5, rtol=1e-5), (
        float(jnp.max(jnp.abs(out - ref))))
    print("KERNEL_OK")
</pallas_src>

<mosaic_0001>
module attributes {stable_mosaic.version = 11 : i64} {
  func.func @_pose_each_kernel(%arg0: i32, %arg1: memref<2x256xf32, #tpu.memory_space<vmem>>, %arg2: memref<256x8xf32, #tpu.memory_space<vmem>>, %arg3: memref<1x8xf32, #tpu.memory_space<vmem>>, %arg4: memref<2x8xf32, #tpu.memory_space<vmem>>) attributes {dimension_semantics = [#tpu.dimension_semantics<parallel>], iteration_bounds = array<i64: 1>, scalar_prefetch = 0 : i64, scratch_operands = 0 : i64, tpu.core_type = #tpu.core_type<tc>, window_params = [{transform_indices = @transform_0, window_bounds = array<i64: 2, 256>}, {pipeline_mode = #tpu.pipeline_mode<synchronous>, transform_indices = @transform_1, window_bounds = array<i64: 256, 8>}, {pipeline_mode = #tpu.pipeline_mode<synchronous>, transform_indices = @transform_2, window_bounds = array<i64: 1, 8>}, {transform_indices = @transform_3, window_bounds = array<i64: 2, 8>}]} {
    %c0 = arith.constant 0 : index
    %c0_0 = arith.constant 0 : index
    %0 = vector.load %arg1[%c0, %c0_0] : memref<2x256xf32, #tpu.memory_space<vmem>>, vector<2x256xf32>
    %c0_1 = arith.constant 0 : index
    %c0_2 = arith.constant 0 : index
    %1 = vector.load %arg2[%c0_1, %c0_2] : memref<256x8xf32, #tpu.memory_space<vmem>>, vector<256x8xf32>
    %cst = arith.constant dense<0.000000e+00> : vector<2x8xf32>
    %2 = tpu.matmul %0, %1, %cst {dimension_numbers = #tpu.dot_dimension_numbers<[1], [0], [0], [1], [0, 0, 1, 1], [], []>} : vector<2x256xf32>, vector<256x8xf32>, vector<2x8xf32> -> vector<2x8xf32>
    %c0_3 = arith.constant 0 : index
    %c0_4 = arith.constant 0 : index
    %3 = vector.load %arg3[%c0_3, %c0_4] : memref<1x8xf32, #tpu.memory_space<vmem>>, vector<1x8xf32>
    %4 = vector.broadcast %3 : vector<1x8xf32> to vector<2x8xf32>
    %5 = arith.addf %2, %4 : vector<2x8xf32>
    %c0_5 = arith.constant 0 : index
    %c0_6 = arith.constant 0 : index
    %6 = vector.load %arg4[%c0_5, %c0_6] : memref<2x8xf32, #tpu.memory_space<vmem>>, vector<2x8xf32>
    tpu.vector_store %arg4[%c0_5, %c0_6], %5 {strides = array<i32>} : memref<2x8xf32, #tpu.memory_space<vmem>>, vector<2x8xf32>,
    return
  }
  func.func @transform_0(%arg0: i32) -> (i32, i32) {
    %c0_i32 = arith.constant 0 : i32
    %c0_i32_0 = arith.constant 0 : i32
    return %arg0, %c0_i32 : i32, i32
  }
  func.func @transform_1(%arg0: i32) -> (i32, i32) {
    %c0_i32 = arith.constant 0 : i32
    %c0_i32_0 = arith.constant 0 : i32
    %c0_i32_1 = arith.constant 0 : i32
    return %c0_i32, %c0_i32_0 : i32, i32
  }
  func.func @transform_2(%arg0: i32) -> (i32, i32) {
    %c0_i32 = arith.constant 0 : i32
    %c0_i32_0 = arith.constant 0 : i32
    %c0_i32_1 = arith.constant 0 : i32
    return %c0_i32, %c0_i32_0 : i32, i32
  }
  func.func @transform_3(%arg0: i32) -> (i32, i32) {
    %c0_i32 = arith.constant 0 : i32
    %c0_i32_0 = arith.constant 0 : i32
    return %arg0, %c0_i32 : i32, i32
  }
}

</mosaic_0001>

<llo_original>
// kernel: tpu_custom_call.1
$region0: #{tpu_custom_call.1}
  #allocation0 [shape = 'u32[]', space=smem, size = 0x4, offset = 0x4, fixed_abs, tag = 'smem constant byte address 0x4 - core index']
  #allocation1 [shape = 'u32[144,128]{1,0:T(1,128)}', space=vmem, size = 0x12000, scoped, tag = 'internal scratch']
  %s0 = inlined_call_operand.vmem [shape: f32[2,256], index: 0, kind: input, shape index: {}]
  %s1 = inlined_call_operand.vmem [shape: f32[256,8], index: 1, kind: input, shape index: {}]
  %s2 = inlined_call_operand.vmem [shape: f32[1,8], index: 2, kind: input, shape index: {}]
  %s3 = inlined_call_operand.hbm [shape: f32[2,8], index: 3, kind: output, shape index: {}]
  %s4 = sld [smem:[#allocation0]]
  $region22: #{tpu_custom_call.1} parent=0
    _
  %s6 = ssub.s32 1, %s4
  %s7 = scalar_select 0, %s6, %s4
  $region1: #{tpu_custom_call.1} parent=0
    #allocation2 [shape = 'u8[1024]{0}', space=vmem, size = 0x400, scoped, tag = 'output window, operand 0, single buffered']
    #allocation3 [shape = 's32[1]{0}', space=sflag, size = 0x4, scoped, tag = 'scoped memory for tpu_custom_call.1']
    %8 = vsyncpa [#allocation3], 0
    // Predicated region
    $region2: #{tpu_custom_call.1} parent=1 // pred_check
      _
    $region3: #{tpu_custom_call.1} parent=1 // pred_check_branch
      %10 = sbr.rel (0) target = $region5
    $region4: #{tpu_custom_call.1} parent=1 // pred_region
      _
    $region5: #{tpu_custom_call.1} parent=1 // pred_fallthru
      _
    // Predicated region
    $region6: #{tpu_custom_call.1} parent=1 // pred_check
      _
    $region7: #{tpu_custom_call.1} parent=1 // pred_check_branch
      %12 = sbr.rel (0) target = $region9
    $region8: #{tpu_custom_call.1} parent=1 // pred_region
      _
    $region9: #{tpu_custom_call.1} parent=1 // pred_fallthru
      _
    // Predicated region
    $region10: #{tpu_custom_call.1} parent=1 // pred_check
      _
    $region11: #{tpu_custom_call.1} parent=1 // pred_check_branch
      %14 = sbr.rel (0) target = $region13
    $region12: #{tpu_custom_call.1} parent=1 // pred_region
      _
    $region13: #{tpu_custom_call.1} parent=1 // pred_fallthru
      _
    %v15 = vld [vmem:[%s0] sm:$0xf]
    %v16 = vld [vmem:[%s1] sm:$0xff]
    %v17 = vld [vmem:[%s1 + $0x8] sm:$0xff]
    %v18 = vld [vmem:[%s1 + $0x10] sm:$0xff]
    %v19 = vld [vmem:[%s1 + $0x18] sm:$0xff]
    %v20 = vld [vmem:[%s1 + $0x20] sm:$0xff]
    %v21 = vld [vmem:[%s1 + $0x28] sm:$0xff]
    %v22 = vld [vmem:[%s1 + $0x30] sm:$0xff]
    %v23 = vld [vmem:[%s1 + $0x38] sm:$0xff]
    %v24 = vld [vmem:[%s1 + $0x40] sm:$0xff]
    %v25 = vld [vmem:[%s1 + $0x48] sm:$0xff]
    %v26 = vld [vmem:[%s1 + $0x50] sm:$0xff]
    %v27 = vld [vmem:[%s1 + $0x58] sm:$0xff]
    %v28 = vld [vmem:[%s1 + $0x60] sm:$0xff]
    %v29 = vld [vmem:[%s1 + $0x68] sm:$0xff]
    %v30 = vld [vmem:[%s1 + $0x70] sm:$0xff]
    %v31 = vld [vmem:[%s1 + $0x78] sm:$0xff]
    %v32 = vld [vmem:[%s1 + $0x80] sm:$0xff]
    %v33 = vld [vmem:[%s1 + $0x88] sm:$0xff]
    %v34 = vld [vmem:[%s1 + $0x90] sm:$0xff]
    %v35 = vld [vmem:[%s1 + $0x98] sm:$0xff]
    %v36 = vld [vmem:[%s1 + $0xa0] sm:$0xff]
    %v37 = vld [vmem:[%s1 + $0xa8] sm:$0xff]
    %v38 = vld [vmem:[%s1 + $0xb0] sm:$0xff]
    %v39 = vld [vmem:[%s1 + $0xb8] sm:$0xff]
    %v40 = vld [vmem:[%s1 + $0xc0] sm:$0xff]
    %v41 = vld [vmem:[%s1 + $0xc8] sm:$0xff]
    %v42 = vld [vmem:[%s1 + $0xd0] sm:$0xff]
    %v43 = vld [vmem:[%s1 + $0xd8] sm:$0xff]
    %v44 = vld [vmem:[%s1 + $0xe0] sm:$0xff]
    %v45 = vld [vmem:[%s1 + $0xe8] sm:$0xff]
    %v46 = vld [vmem:[%s1 + $0xf0] sm:$0xff]
    %v47 = vld [vmem:[%s1 + $0xf8] sm:$0xff]
    %v48 = vld [vmem:[%s2] sm:$0x1]
    %v50 = vlaneseq
    %v51 = vshrl.u32 %v50, 7
    %v52 = vsub.s32 0, %v51
    %v53 = vrot.slane %v48, %v52
    %v57 = vunpack.c.l.s4 1983009808
    %v58 = vunpack.c.0.s8 %v57
    %v59 = vlaneseq
    %v60 = vshrl.u32 %v59, 7
    %v61 = vsub.s32 %v58, %v60
    %v62 = vrot.slane %v15, %v61
    %v63 = vcombine.high %v62, %v62
    %66 = vmatprep.subr.mxu0 0.0
    %67 = vmatpush1.msra.mxu0 %v16
    %68 = vmatprep.subr.mxu0 0.0
    %69 = vmatpush1.msra.mxu0 %v17
    %70 = vmatprep.subr.mxu0 0.0
    %71 = vmatpush1.msra.mxu0 %v18
    %72 = vmatprep.subr.mxu0 0.0
    %73 = vmatpush1.msra.mxu0 %v19
    %74 = vmatprep.subr.mxu0 0.0
    %75 = vmatpush1.msra.mxu0 %v20
    %76 = vmatprep.subr.mxu0 0.0
    %77 = vmatpush1.msra.mxu0 %v21
    %78 = vmatprep.subr.mxu0 0.0
    %79 = vmatpush1.msra.mxu0 %v22
    %80 = vmatprep.subr.mxu0 0.0
    %81 = vmatpush1.msra.mxu0 %v23
    %82 = vmatprep.subr.mxu0 0.0
    %83 = vmatpush1.msra.mxu0 %v24
    %84 = vmatprep.subr.mxu0 0.0
    %85 = vmatpush1.msra.mxu0 %v25
    %86 = vmatprep.subr.mxu0 0.0
    %87 = vmatpush1.msra.mxu0 %v26
    %88 = vmatprep.subr.mxu0 0.0
    %89 = vmatpush1.msra.mxu0 %v27
    %90 = vmatprep.subr.mxu0 0.0
    %91 = vmatpush1.msra.mxu0 %v28
    %92 = vmatprep.subr.mxu0 0.0
    %93 = vmatpush1.msra.mxu0 %v29
    %94 = vmatprep.subr.mxu0 0.0
    %95 = vmatpush1.msra.mxu0 %v30
    %96 = vmatprep.subr.mxu0 0.0
    %97 = vmatpush1.msra.mxu0 %v31
    %98 = vmatprep.subr.mxu0 0.0
    %99 = vmatpush1.msra.mxu0 %v32
    %100 = vmatprep.subr.mxu0 0.0
    %101 = vmatpush1.msra.mxu0 %v33
    %102 = vmatprep.subr.mxu0 0.0
    %103 = vmatpush1.msra.mxu0 %v34
    %104 = vmatprep.subr.mxu0 0.0
    %105 = vmatpush1.msra.mxu0 %v35
    %106 = vmatprep.subr.mxu0 0.0
    %107 = vmatpush1.msra.mxu0 %v36
    %108 = vmatprep.subr.mxu0 0.0
    %109 = vmatpush1.msra.mxu0 %v37
    %110 = vmatprep.subr.mxu0 0.0
    %111 = vmatpush1.msra.mxu0 %v38
    %112 = vmatprep.subr.mxu0 0.0
    %113 = vmatpush1.msra.mxu0 %v39
    %114 = vmatprep.subr.mxu0 0.0
    %115 = vmatpush1.msra.mxu0 %v40
    %116 = vmatprep.subr.mxu0 0.0
    %117 = vmatpush1.msra.mxu0 %v41
    %118 = vmatprep.subr.mxu0 0.0
    %119 = vmatpush1.msra.mxu0 %v42
    %120 = vmatprep.subr.mxu0 0.0
    %121 = vmatpush1.msra.mxu0 %v43
    %122 = vmatprep.subr.mxu0 0.0
    %123 = vmatpush1.msra.mxu0 %v44
    %124 = vmatprep.subr.mxu0 0.0
    %125 = vmatpush1.msra.mxu0 %v45
    %126 = vmatprep.subr.mxu0 0.0
    %127 = vmatpush1.msra.mxu0 %v46
    %128 = vmatprep.subr.mxu0 0.0
    %129 = vmatpush1.msra.mxu0 %v47
    %130 = vmatprep.mubr.f32.mxu0 %v63
    %131 = vmatmul.mubr.f32.gmra.mrb[0].mxu0 %v62
    %v132 = vpop.f32.mrb[0].mxu0
    %v133 = vadd.f32 %v53, %v132
    %v134 = vpop.f32.mrb[0].mxu0
    %135 = vdwg.mxu0
    %vm136 = vcmask 58368
    %137 = vst.msk [vmem:[#allocation2] sm:$0x3] %vm136, %v133
    // Predicated region
    $region14: #{tpu_custom_call.1} parent=1 // pred_check
      _
    $region15: #{tpu_custom_call.1} parent=1 // pred_check_branch
      %139 = sbr.rel (0) target = $region17
    $region16: #{tpu_custom_call.1} parent=1 // pred_region
      %s141 = ssub.s32 32, 32
      %142 = vsyncadd [#allocation3], %s141
      %s144 = sshll.u32 [#allocation2], 4
      %s145 = int_to_ptr.vmem [resolvable:$true] %s144
      %147 = dma.vmem_to_hbm [thread:$0]  %s145, 32, %s3, [#allocation3]
    $region17: #{tpu_custom_call.1} parent=1 // pred_fallthru
      _
    // Predicated region
    $region18: #{tpu_custom_call.1} parent=1 // pred_check
      _
    $region19: #{tpu_custom_call.1} parent=1 // pred_check_branch
      %149 = sbr.rel (0) target = $region21
    $region20: #{tpu_custom_call.1} parent=1 // pred_region
      %150 = dma.done [#allocation3], 32
    $region21: #{tpu_custom_call.1} parent=1 // pred_fallthru
      _
    %151 = vsyncpa [#allocation3], 1

</llo_original>
